<compile_context>
chip_gen: v7x
topology: tpu7x:2x2x1
jax: 0.10.0
libtpu: 0.0.40
codegen_flags: <defaults>
</compile_context>

<pallas_src>
import jax
import jax.numpy as jnp
from jax.experimental import pallas as pl
from jax.experimental.pallas import tpu as pltpu


def _se_kernel(x_ref, w1_ref, b1_ref, w2_ref, b2_ref, o_ref):
    # x_ref / o_ref: (Bt, C, HW) in the I/O dtype; params are f32.
    # ---- squeeze: global average pool over spatial positions (f32 accum) ----
    pooled = jnp.mean(x_ref[...].astype(jnp.float32), axis=-1)      # (Bt, C)

    w1 = w1_ref[...].astype(jnp.float32)                            # (C, Cr)
    b1 = b1_ref[...].astype(jnp.float32)                            # (1, Cr)
    w2 = w2_ref[...].astype(jnp.float32)                            # (Cr, C)
    b2 = b2_ref[...].astype(jnp.float32)                            # (1, C)

    bt = pooled.shape[0]                                            # static
    if bt < 8:
        # VPU path: broadcast-multiply + sublane reduction. Avoids paying MXU
        # fill + result-FIFO pop latency twice on a degenerate (M<8) matmul
        # inside the serial mean->mm->relu->mm->sigmoid->scale chain.
        h = jnp.sum(pooled[:, :, None] * w1[None, :, :], axis=1) + b1
        h = jnp.maximum(h, 0.0)
        s = jnp.sum(h[:, :, None] * w2[None, :, :], axis=1) + b2
    else:
        # MXU path: Bt rows make the matmul non-degenerate.
        h = jnp.dot(pooled, w1, preferred_element_type=jnp.float32) + b1
        h = jnp.maximum(h, 0.0)
        s = jnp.dot(h, w2, preferred_element_type=jnp.float32) + b2
    s = jax.nn.sigmoid(s)                                           # (Bt, C)

    # ---- scale: re-read x from VMEM (don't hold the slab live across MLP) ----
    xv = x_ref[...]
    o_ref[...] = (xv * s[:, :, None].astype(xv.dtype)).astype(o_ref.dtype)


def squeeze_excite(x, w1, b1, w2, b2):
    """SqueezeExcite forward.

    x : (B, C, H, W), f32 or bf16 (output matches x.dtype; math in f32).
    w1: (C//r, C)   -- PyTorch nn.Linear weight layout (out_features, in_features)
    b1: (C//r,)
    w2: (C, C//r)
    b2: (C,)
    """
    b, c, h, w = x.shape
    hw = h * w
    hidden = w1.shape[0]
    assert w1.shape == (hidden, c) and w2.shape == (c, hidden)
    assert b1.shape == (hidden,) and b2.shape == (c,)

    xr = x.reshape(b, c, hw)
    # Transpose to (in, out) so the kernel does plain row-major matmuls.
    w1t = jnp.asarray(w1, jnp.float32).T                 # (C, Cr)
    b1r = jnp.asarray(b1, jnp.float32).reshape(1, hidden)
    w2t = jnp.asarray(w2, jnp.float32).T                 # (Cr, C)
    b2r = jnp.asarray(b2, jnp.float32).reshape(1, c)

    itemsize = jnp.dtype(x.dtype).itemsize
    per_batch_bytes = c * hw * itemsize
    param_bytes = (w1t.size + b1r.size + w2t.size + b2r.size) * 4

    # ---------------- generation-aware VMEM budgeting ----------------
    try:
        vmem_cap = int(pltpu.get_tpu_info().vmem_capacity_bytes)
    except Exception:                                    # pragma: no cover
        vmem_cap = 64 << 20                              # conservative (v7x)
    usable = (vmem_cap * 3) // 4                         # headroom for Mosaic scratch

    # Params: constant index_map; single-buffer them once they are big enough
    # to matter (negligible at small C, 4-8 MiB for C~2048 SE blocks).
    param_nbuf = 1 if param_bytes > (1 << 20) else 2
    param_resident = param_nbuf * param_bytes

    # I/O slabs: double-buffer if it fits, else fall back to single buffering.
    nbuf = 2
    if 2 * nbuf * per_batch_bytes + param_resident > usable:
        nbuf = 1

    # ---------------- batch-block (Bt) selection ----------------------
    # big enough that each slab DMA is >= ~2 MiB ...
    bt_dma = -(-(2 << 20) // per_batch_bytes)
    # ... small enough that (in+out) x nbuf buffers + params fit the budget ...
    bt_vmem = max(1, (usable - param_resident) // (2 * nbuf * per_batch_bytes))
    # ... and keep >= ~4 grid steps so both v7x TensorCores get a pipeline.
    bt_grid = max(1, b // 4)
    bt = max(1, min(bt_dma, bt_vmem, bt_grid, b))
    while b % bt:                                        # exact blocks only
        bt -= 1
    grid = (b // bt,)

    residency = 2 * nbuf * bt * per_batch_bytes + param_resident
    vmem_limit = int(residency + (8 << 20))              # never below residency

    io_kwargs = {} if nbuf == 2 else {"pipeline_mode": pl.Buffered(1)}
    x_spec = pl.BlockSpec((bt, c, hw), lambda i: (i, 0, 0), **io_kwargs)
    out_spec = pl.BlockSpec((bt, c, hw), lambda i: (i, 0, 0), **io_kwargs)

    def _param_spec(shape):
        if param_nbuf == 1:
            return pl.BlockSpec(shape, lambda i: (0, 0),
                                pipeline_mode=pl.Buffered(1))
        return pl.BlockSpec(shape, lambda i: (0, 0))

    grid_spec = pltpu.PrefetchScalarGridSpec(
        num_scalar_prefetch=0,
        grid=grid,
        in_specs=[
            x_spec,
            _param_spec((c, hidden)),
            _param_spec((1, hidden)),
            _param_spec((hidden, c)),
            _param_spec((1, c)),
        ],
        out_specs=out_spec,
    )

    out = pl.pallas_call(
        _se_kernel,
        out_shape=jax.ShapeDtypeStruct((b, c, hw), x.dtype),
        grid_spec=grid_spec,
        compiler_params=pltpu.CompilerParams(
            dimension_semantics=("parallel",),
            vmem_limit_bytes=vmem_limit,
        ),
    )(xr, w1t, b1r, w2t, b2r)
    return out.reshape(b, c, h, w)


def squeeze_excite_ref(x, w1, b1, w2, b2):
    """Pure-JAX reference matching the PyTorch module (f32 math)."""
    bb, cc, hh, ww = x.shape
    xf = x.astype(jnp.float32)
    pooled = xf.reshape(bb, cc, hh * ww).mean(axis=-1)
    hdn = jnp.maximum(pooled @ w1.T + b1, 0.0)
    s = jax.nn.sigmoid(hdn @ w2.T + b2)
    return (xf * s[:, :, None, None]).astype(x.dtype)


if __name__ == "__main__":
    key = jax.random.PRNGKey(0)

    configs = [
        # (B, C, H, W, r, io_dtype, tol)
        (2, 32, 16, 16, 8, jnp.float32, 1e-5),    # small (Bt=1, VPU MLP path)
        (16, 64, 8, 8, 8, jnp.float32, 1e-5),     # Bt>1, HW not a 128-multiple
        (32, 64, 16, 16, 8, jnp.float32, 1e-5),   # Bt>=8 -> MXU MLP path
        (2, 32, 16, 16, 8, jnp.bfloat16, 2e-2),   # bf16 I/O path
    ]

    for (B, C, H, W, r, dtype, tol) in configs:
        hidden = C // r
        key, kx, k1, k2, k3, k4 = jax.random.split(key, 6)

        x = jax.random.normal(kx, (B, C, H, W), dtype=jnp.float32).astype(dtype)
        # PyTorch nn.Linear layout: weight is (out_features, in_features).
        w1 = jax.random.normal(k1, (hidden, C), dtype=jnp.float32) * 0.1
        b1 = jax.random.normal(k2, (hidden,), dtype=jnp.float32) * 0.1
        w2 = jax.random.normal(k3, (C, hidden), dtype=jnp.float32) * 0.1
        b2 = jax.random.normal(k4, (C,), dtype=jnp.float32) * 0.1

        out = jax.block_until_ready(squeeze_excite(x, w1, b1, w2, b2))
        ref = squeeze_excite_ref(x, w1, b1, w2, b2)

        assert out.shape == x.shape and out.dtype == x.dtype
        assert jnp.allclose(out.astype(jnp.float32), ref.astype(jnp.float32),
                            atol=tol, rtol=tol), \
            f"mismatch vs reference at {(B, C, H, W, str(dtype))}"

    print("KERNEL_OK")
</pallas_src>

<mosaic_0001>
module attributes {stable_mosaic.version = 11 : i64} {
  func.func @_se_kernel(%arg0: i32, %arg1: memref<1x32x256xf32, #tpu.memory_space<vmem>>, %arg2: memref<32x4xf32, #tpu.memory_space<vmem>>, %arg3: memref<1x4xf32, #tpu.memory_space<vmem>>, %arg4: memref<4x32xf32, #tpu.memory_space<vmem>>, %arg5: memref<1x32xf32, #tpu.memory_space<vmem>>, %arg6: memref<1x32x256xf32, #tpu.memory_space<vmem>>) attributes {dimension_semantics = [#tpu.dimension_semantics<parallel>], iteration_bounds = array<i64: 2>, scalar_prefetch = 0 : i64, scratch_operands = 0 : i64, tpu.core_type = #tpu.core_type<tc>, window_params = [{transform_indices = @transform_0, window_bounds = array<i64: 1, 32, 256>}, {pipeline_mode = #tpu.pipeline_mode<synchronous>, transform_indices = @transform_1, window_bounds = array<i64: 32, 4>}, {pipeline_mode = #tpu.pipeline_mode<synchronous>, transform_indices = @transform_2, window_bounds = array<i64: 1, 4>}, {pipeline_mode = #tpu.pipeline_mode<synchronous>, transform_indices = @transform_3, window_bounds = array<i64: 4, 32>}, {pipeline_mode = #tpu.pipeline_mode<synchronous>, transform_indices = @transform_4, window_bounds = array<i64: 1, 32>}, {transform_indices = @transform_5, window_bounds = array<i64: 1, 32, 256>}]} {
    %c0 = arith.constant 0 : index
    %c0_0 = arith.constant 0 : index
    %c0_1 = arith.constant 0 : index
    %0 = vector.load %arg1[%c0, %c0_0, %c0_1] : memref<1x32x256xf32, #tpu.memory_space<vmem>>, vector<1x32x256xf32>
    %cst = arith.constant dense<0.000000e+00> : vector<1x32xf32>
    %1 = vector.multi_reduction <add>, %0, %cst [2] : vector<1x32x256xf32> to vector<1x32xf32>
    %cst_2 = arith.constant 2.560000e+02 : f32
    %2 = vector.broadcast %cst_2 : f32 to vector<1x32xf32>
    %3 = arith.divf %1, %2 : vector<1x32xf32>
    %c0_3 = arith.constant 0 : index
    %c0_4 = arith.constant 0 : index
    %4 = vector.load %arg2[%c0_3, %c0_4] : memref<32x4xf32, #tpu.memory_space<vmem>>, vector<32x4xf32>
    %c0_5 = arith.constant 0 : index
    %c0_6 = arith.constant 0 : index
    %5 = vector.load %arg3[%c0_5, %c0_6] : memref<1x4xf32, #tpu.memory_space<vmem>>, vector<1x4xf32>
    %c0_7 = arith.constant 0 : index
    %c0_8 = arith.constant 0 : index
    %6 = vector.load %arg4[%c0_7, %c0_8] : memref<4x32xf32, #tpu.memory_space<vmem>>, vector<4x32xf32>
    %c0_9 = arith.constant 0 : index
    %c0_10 = arith.constant 0 : index
    %7 = vector.load %arg5[%c0_9, %c0_10] : memref<1x32xf32, #tpu.memory_space<vmem>>, vector<1x32xf32>
    %8 = vector.shape_cast %3 : vector<1x32xf32> to vector<1x32x1xf32>
    %9 = vector.shape_cast %4 : vector<32x4xf32> to vector<1x32x4xf32>
    %10 = vector.broadcast %8 : vector<1x32x1xf32> to vector<1x32x4xf32>
    %11 = arith.mulf %10, %9 : vector<1x32x4xf32>
    %cst_11 = arith.constant dense<0.000000e+00> : vector<1x4xf32>
    %12 = vector.multi_reduction <add>, %11, %cst_11 [1] : vector<1x32x4xf32> to vector<1x4xf32>
    %13 = arith.addf %12, %5 : vector<1x4xf32>
    %cst_12 = arith.constant 0.000000e+00 : f32
    %14 = vector.broadcast %cst_12 : f32 to vector<1x4xf32>
    %15 = arith.maximumf %13, %14 : vector<1x4xf32>
    %16 = vector.shape_cast %15 : vector<1x4xf32> to vector<1x4x1xf32>
    %17 = vector.shape_cast %6 : vector<4x32xf32> to vector<1x4x32xf32>
    %18 = vector.broadcast %16 : vector<1x4x1xf32> to vector<1x4x32xf32>
    %19 = arith.mulf %18, %17 : vector<1x4x32xf32>
    %cst_13 = arith.constant dense<0.000000e+00> : vector<1x32xf32>
    %20 = vector.multi_reduction <add>, %19, %cst_13 [1] : vector<1x4x32xf32> to vector<1x32xf32>
    %21 = arith.addf %20, %7 : vector<1x32xf32>
    %22 = arith.negf %21 : vector<1x32xf32>
    %23 = math.exp %22 : vector<1x32xf32>
    %cst_14 = arith.constant 1.000000e+00 : f32
    %24 = vector.broadcast %cst_14 : f32 to vector<1x32xf32>
    %25 = arith.addf %24, %23 : vector<1x32xf32>
    %26 = arith.divf %24, %25 : vector<1x32xf32>
    %c0_15 = arith.constant 0 : index
    %c0_16 = arith.constant 0 : index
    %c0_17 = arith.constant 0 : index
    %27 = vector.load %arg1[%c0_15, %c0_16, %c0_17] : memref<1x32x256xf32, #tpu.memory_space<vmem>>, vector<1x32x256xf32>
    %28 = vector.shape_cast %26 : vector<1x32xf32> to vector<1x32x1xf32>
    %29 = vector.broadcast %28 : vector<1x32x1xf32> to vector<1x32x256xf32>
    %30 = arith.mulf %27, %29 : vector<1x32x256xf32>
    %c0_18 = arith.constant 0 : index
    %c0_19 = arith.constant 0 : index
    %c0_20 = arith.constant 0 : index
    %31 = vector.load %arg6[%c0_18, %c0_19, %c0_20] : memref<1x32x256xf32, #tpu.memory_space<vmem>>, vector<1x32x256xf32>
    tpu.vector_store %arg6[%c0_18, %c0_19, %c0_20], %30 {strides = array<i32>} : memref<1x32x256xf32, #tpu.memory_space<vmem>>, vector<1x32x256xf32>,
    return
  }
  func.func @transform_0(%arg0: i32) -> (i32, i32, i32) {
    %c0_i32 = arith.constant 0 : i32
    %c0_i32_0 = arith.constant 0 : i32
    %c0_i32_1 = arith.constant 0 : i32
    return %arg0, %c0_i32, %c0_i32_0 : i32, i32, i32
  }
  func.func @transform_1(%arg0: i32) -> (i32, i32) {
    %c0_i32 = arith.constant 0 : i32
    %c0_i32_0 = arith.constant 0 : i32
    %c0_i32_1 = arith.constant 0 : i32
    return %c0_i32, %c0_i32_0 : i32, i32
  }
  func.func @transform_2(%arg0: i32) -> (i32, i32) {
    %c0_i32 = arith.constant 0 : i32
    %c0_i32_0 = arith.constant 0 : i32
    %c0_i32_1 = arith.constant 0 : i32
    return %c0_i32, %c0_i32_0 : i32, i32
  }
  func.func @transform_3(%arg0: i32) -> (i32, i32) {
    %c0_i32 = arith.constant 0 : i32
    %c0_i32_0 = arith.constant 0 : i32
    %c0_i32_1 = arith.constant 0 : i32
    return %c0_i32, %c0_i32_0 : i32, i32
  }
  func.func @transform_4(%arg0: i32) -> (i32, i32) {
    %c0_i32 = arith.constant 0 : i32
    %c0_i32_0 = arith.constant 0 : i32
    %c0_i32_1 = arith.constant 0 : i32
    return %c0_i32, %c0_i32_0 : i32, i32
  }
  func.func @transform_5(%arg0: i32) -> (i32, i32, i32) {
    %c0_i32 = arith.constant 0 : i32
    %c0_i32_0 = arith.constant 0 : i32
    %c0_i32_1 = arith.constant 0 : i32
    return %arg0, %c0_i32, %c0_i32_0 : i32, i32, i32
  }
}

</mosaic_0001>

<llo_original>
// kernel: tpu_custom_call.1
$region0: #{tpu_custom_call.1}
  #allocation0 [shape = 'u32[]', space=smem, size = 0x4, offset = 0x4, fixed_abs, tag = 'smem constant byte address 0x4 - core index']
  #allocation1 [shape = 'u32[144,128]{1,0:T(1,128)}', space=vmem, size = 0x12000, scoped, tag = 'internal scratch']
  %s0 = inlined_call_operand.hbm [shape: f32[2,32,256], index: 0, kind: input, shape index: {}]
  %s1 = inlined_call_operand.vmem [shape: f32[32,4], index: 1, kind: input, shape index: {}]
  %s2 = inlined_call_operand.vmem [shape: f32[1,4], index: 2, kind: input, shape index: {}]
  %s3 = inlined_call_operand.vmem [shape: f32[4,32], index: 3, kind: input, shape index: {}]
  %s4 = inlined_call_operand.vmem [shape: f32[1,32], index: 4, kind: input, shape index: {}]
  %s5 = inlined_call_operand.hbm [shape: f32[2,32,256], index: 5, kind: output, shape index: {}]
  %s6 = sld [smem:[#allocation0]]
  $region57: #{tpu_custom_call.1} parent=0
    _
  %s8 = ssub.s32 1, %s6
  %s9 = scalar_select 0, %s8, %s6
  $region1: #{tpu_custom_call.1} parent=0
    #allocation2 [shape = 'u8[65536]{0}', space=vmem, size = 0x10000, scoped, tag = 'input window, operand 0']
    #allocation3 [shape = 's32[2]{0}', space=sflag, size = 0x8, scoped, tag = 'scoped memory for tpu_custom_call.1']
    #allocation4 [shape = 's32[2]{0}', space=sflag, size = 0x8, scoped, tag = 'scoped memory for tpu_custom_call.1']
    #allocation5 [shape = 'u8[65536]{0}', space=vmem, size = 0x10000, scoped, tag = 'output window, operand 0']
    %10 = vsyncpa [#allocation3], 0
    %s11 = scalar_lea.sflag [#allocation3], 1
    %12 = vsyncpa %s11, 0
    %13 = vsyncpa [#allocation4], 0
    %s14 = scalar_lea.sflag [#allocation4], 1
    %15 = vsyncpa %s14, 0
    loop: start=0, step=1, limit=4
    $region2: #{tpu_custom_call.1} parent=1 // loop_pre_header
      _
    $region3: #{tpu_custom_call.1} parent=1 // loop_header
      %s17 = sphi 0, %s21
      %p18 = scmp.ge.s32.totalorder %s17, 4
      %s27 = sphi 0, %s29
      %s30 = sphi 0, %s27
      %s31 = sphi 0, %s30
      %s47 = sphi 0, %s31
      %s51 = sphi 0, %s51
      %s53 = sphi 0, %s51
      %s54 = sphi 0, %s53
      %s68 = sphi 0, %s54
      %s72 = sphi 0, %s72
      %s74 = sphi 0, %s72
      %s75 = sphi 0, %s74
      %s89 = sphi 0, %s75
      %s93 = sphi 0, %s93
      %s95 = sphi 0, %s93
      %s96 = sphi 0, %s95
      %s110 = sphi 0, %s96
      %s114 = sphi 0, %s114
      %s116 = sphi 0, %s114
      %s117 = sphi 0, %s116
      %s131 = sphi 0, %s117
      %s137 = sphi 0, %s139
      %s140 = sphi 0, %s137
      %s141 = sphi 0, %s140
      %s157 = sphi 0, %s141
    $region4: #{tpu_custom_call.1} parent=1 // loop_header_branch
      %20 = sbr.rel (%p18) target = $region8
    $region5: #{tpu_custom_call.1} parent=1 // loop_body
      %s22 = ssub.s32 %s17, 1
      %s23 = ssub.s32 %s17, 2
      %s24 = sadd.s32 %s17, 1
      %s25 = ssub.s32 %s17, %s24
      %p26 = scmp.eq.s32.totalorder %s25, 0
      %s28 = sadd.s32 %s27, 1
      %s29 = scalar_select %p26, %s27, %s28
      %p32 = pneg %p26
      %p33 = scmp.eq.s32.totalorder %s17, 1
      %p34 = por %p32, %p33
      %p35 = scmp.ne.s32.totalorder %s27, %s30
      %p36 = scmp.eq.s32.totalorder %s17, 0
      %p37 = por %p35, %p36
      %p38 = scmp.ne.s32.totalorder %s27, %s30
      %p39 = scmp.eq.s32.totalorder %s22, 1
      %p40 = por %p38, %p39
      %p41 = scmp.ne.s32.totalorder %s30, %s31
      %p42 = scmp.eq.s32.totalorder %s22, 0
      %p43 = por %p41, %p42
      %p44 = scmp.ne.s32.totalorder %s30, %s31
      %p45 = scmp.eq.s32.totalorder %s23, 1
      %p46 = por %p44, %p45
      %p48 = scmp.ne.s32.totalorder %s31, %s47
      %p49 = scmp.eq.s32.totalorder %s23, 0
      %p50 = por %p48, %p49
      %s52 = sadd.s32 %s51, 1
      %p55 = scmp.eq.s32.totalorder %s17, 1
      %p56 = scmp.ne.s32.totalorder %s51, %s53
      %p57 = scmp.eq.s32.totalorder %s17, 0
      %p58 = por %p56, %p57
      %p59 = scmp.ne.s32.totalorder %s51, %s53
      %p60 = scmp.eq.s32.totalorder %s22, 1
      %p61 = por %p59, %p60
      %p62 = scmp.ne.s32.totalorder %s53, %s54
      %p63 = scmp.eq.s32.totalorder %s22, 0
      %p64 = por %p62, %p63
      %p65 = scmp.ne.s32.totalorder %s53, %s54
      %p66 = scmp.eq.s32.totalorder %s23, 1
      %p67 = por %p65, %p66
      %p69 = scmp.ne.s32.totalorder %s54, %s68
      %p70 = scmp.eq.s32.totalorder %s23, 0
      %p71 = por %p69, %p70
      %s73 = sadd.s32 %s72, 1
      %p76 = scmp.eq.s32.totalorder %s17, 1
      %p77 = scmp.ne.s32.totalorder %s72, %s74
      %p78 = scmp.eq.s32.totalorder %s17, 0
      %p79 = por %p77, %p78
      %p80 = scmp.ne.s32.totalorder %s72, %s74
      %p81 = scmp.eq.s32.totalorder %s22, 1
      %p82 = por %p80, %p81
      %p83 = scmp.ne.s32.totalorder %s74, %s75
      %p84 = scmp.eq.s32.totalorder %s22, 0
      %p85 = por %p83, %p84
      %p86 = scmp.ne.s32.totalorder %s74, %s75
      %p87 = scmp.eq.s32.totalorder %s23, 1
      %p88 = por %p86, %p87
      %p90 = scmp.ne.s32.totalorder %s75, %s89
      %p91 = scmp.eq.s32.totalorder %s23, 0
      %p92 = por %p90, %p91
      %s94 = sadd.s32 %s93, 1
      %p97 = scmp.eq.s32.totalorder %s17, 1
      %p98 = scmp.ne.s32.totalorder %s93, %s95
      %p99 = scmp.eq.s32.totalorder %s17, 0
      %p100 = por %p98, %p99
      %p101 = scmp.ne.s32.totalorder %s93, %s95
      %p102 = scmp.eq.s32.totalorder %s22, 1
      %p103 = por %p101, %p102
      %p104 = scmp.ne.s32.totalorder %s95, %s96
      %p105 = scmp.eq.s32.totalorder %s22, 0
      %p106 = por %p104, %p105
      %p107 = scmp.ne.s32.totalorder %s95, %s96
      %p108 = scmp.eq.s32.totalorder %s23, 1
      %p109 = por %p107, %p108
      %p111 = scmp.ne.s32.totalorder %s96, %s110
      %p112 = scmp.eq.s32.totalorder %s23, 0
      %p113 = por %p111, %p112
      %s115 = sadd.s32 %s114, 1
      %p118 = scmp.eq.s32.totalorder %s17, 1
      %p119 = scmp.ne.s32.totalorder %s114, %s116
      %p120 = scmp.eq.s32.totalorder %s17, 0
      %p121 = por %p119, %p120
      %p122 = scmp.ne.s32.totalorder %s114, %s116
      %p123 = scmp.eq.s32.totalorder %s22, 1
      %p124 = por %p122, %p123
      %p125 = scmp.ne.s32.totalorder %s116, %s117
      %p126 = scmp.eq.s32.totalorder %s22, 0
      %p127 = por %p125, %p126
      %p128 = scmp.ne.s32.totalorder %s116, %s117
      %p129 = scmp.eq.s32.totalorder %s23, 1
      %p130 = por %p128, %p129
      %p132 = scmp.ne.s32.totalorder %s117, %s131
      %p133 = scmp.eq.s32.totalorder %s23, 0
      %p134 = por %p132, %p133
      %s135 = ssub.s32 %s17, %s24
      %p136 = scmp.eq.s32.totalorder %s135, 0
      %s138 = sadd.s32 %s137, 1
      %s139 = scalar_select %p136, %s137, %s138
      %p142 = pneg %p136
      %p143 = scmp.eq.s32.totalorder %s17, 1
      %p144 = por %p142, %p143
      %p145 = scmp.ne.s32.totalorder %s137, %s140
      %p146 = scmp.eq.s32.totalorder %s17, 0
      %p147 = por %p145, %p146
      %p148 = scmp.ne.s32.totalorder %s137, %s140
      %p149 = scmp.eq.s32.totalorder %s22, 1
      %p150 = por %p148, %p149
      %p151 = scmp.ne.s32.totalorder %s140, %s141
      %p152 = scmp.eq.s32.totalorder %s22, 0
      %p153 = por %p151, %p152
      %p154 = scmp.ne.s32.totalorder %s140, %s141
      %p155 = scmp.eq.s32.totalorder %s23, 1
      %p156 = por %p154, %p155
      %p158 = scmp.ne.s32.totalorder %s141, %s157
      %p159 = scmp.eq.s32.totalorder %s23, 0
      %p160 = por %p158, %p159
      %p161 = scmp.le.s32.totalorder 1, %s17
      %p162 = scmp.lt.s32.totalorder %s17, 3
      %p163 = pnand %p161, %p162
      %p164 = pneg %p163
      // Predicated region
      $region9: #{tpu_custom_call.1} parent=5 // pred_check
        _
      $region10: #{tpu_custom_call.1} parent=5 // pred_check_branch
        %166 = sbr.rel (%p163) target = $region12
      $region11: #{tpu_custom_call.1} parent=5 // pred_region
        %s167 = ssub.s32 %s17, 1
        // Predicated region
        $region13: #{tpu_custom_call.1} parent=11 // pred_check
          %p168 = pneg %p64
        $region14: #{tpu_custom_call.1} parent=11 // pred_check_branch
          %170 = sbr.rel (%p168) target = $region16
        $region15: #{tpu_custom_call.1} parent=11 // pred_region
          _
        $region16: #{tpu_custom_call.1} parent=11 // pred_fallthru
          _
        // Predicated region
        $region17: #{tpu_custom_call.1} parent=11 // pred_check
          %p171 = pneg %p85
        $region18: #{tpu_custom_call.1} parent=11 // pred_check_branch
          %173 = sbr.rel (%p171) target = $region20
        $region19: #{tpu_custom_call.1} parent=11 // pred_region
          _
        $region20: #{tpu_custom_call.1} parent=11 // pred_fallthru
          _
        // Predicated region
        $region21: #{tpu_custom_call.1} parent=11 // pred_check
          %p174 = pneg %p106
        $region22: #{tpu_custom_call.1} parent=11 // pred_check_branch
          %176 = sbr.rel (%p174) target = $region24
        $region23: #{tpu_custom_call.1} parent=11 // pred_region
          _
        $region24: #{tpu_custom_call.1} parent=11 // pred_fallthru
          _
        // Predicated region
        $region25: #{tpu_custom_call.1} parent=11 // pred_check
          %p177 = pneg %p127
        $region26: #{tpu_custom_call.1} parent=11 // pred_check_branch
          %179 = sbr.rel (%p177) target = $region28
        $region27: #{tpu_custom_call.1} parent=11 // pred_region
          _
        $region28: #{tpu_custom_call.1} parent=11 // pred_fallthru
          _
      $region12: #{tpu_custom_call.1} parent=5 // pred_fallthru
        _
      %p180 = scmp.lt.s32.totalorder %s17, 2
      // Predicated region
      $region29: #{tpu_custom_call.1} parent=5 // pred_check
        %p181 = pneg %p180
      $region30: #{tpu_custom_call.1} parent=5 // pred_check_branch
        %183 = sbr.rel (%p181) target = $region32
      $region31: #{tpu_custom_call.1} parent=5 // pred_region
        // Predicated region
        $region33: #{tpu_custom_call.1} parent=31 // pred_check
          %p184 = pneg %p37
        $region34: #{tpu_custom_call.1} parent=31 // pred_check_branch
          %186 = sbr.rel (%p184) target = $region36
        $region35: #{tpu_custom_call.1} parent=31 // pred_region
          %s187 = sand.u32 %s27, 1
          %s188 = scalar_lea.sflag [#allocation3], %s187
          %s189 = sand.u32 %s27, 1
          %s190 = smul.addr %s189, 64
          %s191 = scalar_lea.vmem [#allocation2], %s190
          %s193 = ssub.s32 1024, 1024
          %194 = vsyncadd %s188, %s193
          %s195 = smul.addr %s17, 8
          %s196 = smul.addr %s195, 128
          %s197 = scalar_lea.hbm %s0, %s196
          %s198 = sshll.u32 %s191, 4
          %s199 = int_to_ptr.vmem [resolvable:$true] %s198
          %204 = dma.hbm_to_vmem [thread:$0]  %s197, 1024, %s199, %s188, 256, 256, 16
        $region36: #{tpu_custom_call.1} parent=31 // pred_fallthru
          _
      $region32: #{tpu_custom_call.1} parent=5 // pred_fallthru
        _
      %p205 = scmp.le.s32.totalorder 1, %s17
      %p206 = scmp.lt.s32.totalorder %s17, 3
      %p207 = pnand %p205, %p206
      %p208 = pneg %p207
      // Predicated region
      $region37: #{tpu_custom_call.1} parent=5 // pred_check
        _
      $region38: #{tpu_custom_call.1} parent=5 // pred_check_branch
        %210 = sbr.rel (%p207) target = $region40
      $region39: #{tpu_custom_call.1} parent=5 // pred_region
        %s211 = ssub.s32 %s17, 1
        %s212 = sand.u32 %s30, 1
        %s213 = scalar_lea.sflag [#allocation3], %s212
        %s214 = sand.u32 %s30, 1
        %s215 = smul.addr %s214, 64
        %s216 = scalar_lea.vmem [#allocation2], %s215
        // Predicated region
        $region41: #{tpu_custom_call.1} parent=39 // pred_check
          %p217 = pneg %p43
        $region42: #{tpu_custom_call.1} parent=39 // pred_check_branch
          %219 = sbr.rel (%p217) target = $region44
        $region43: #{tpu_custom_call.1} parent=39 // pred_region
          %220 = dma.done %s213, 1024
        $region44: #{tpu_custom_call.1} parent=39 // pred_fallthru
          _
        %s221 = sand.u32 %s30, 1
        %s222 = scalar_lea.sflag [#allocation3], %s221
        %s223 = sand.u32 %s30, 1
        %s224 = smul.addr %s223, 64
        %s225 = scalar_lea.vmem [#allocation2], %s224
        %p226 = pneg %p43
        %p227 = pneg %p40
        %p228 = pneg %p64
        %p229 = pneg %p61
        %p230 = pneg %p85
        %p231 = pneg %p82
        %p232 = pneg %p106
        %p233 = pneg %p103
        %p234 = pneg %p127
        %p235 = pneg %p124
        %p236 = pneg %p153
        %p237 = pneg %p150
        %s238 = sand.u32 %s140, 1
        %s239 = scalar_lea.sflag [#allocation4], %s238
        %s240 = sand.u32 %s140, 1
        %s241 = smul.addr %s240, 64
        %s242 = scalar_lea.vmem [#allocation5], %s241
        %v243 = vld [vmem:[%s216] sm:$0xff]
        %v244 = vld [vmem:[%s216 + $0x8] sm:$0xff]
        %v245 = vld [vmem:[%s216 + $0x10] sm:$0xff]
        %v246 = vld [vmem:[%s216 + $0x18] sm:$0xff]
        %v247 = vld [vmem:[%s216 + $0x20] sm:$0xff]
        %v248 = vld [vmem:[%s216 + $0x28] sm:$0xff]
        %v249 = vld [vmem:[%s216 + $0x30] sm:$0xff]
        %v250 = vld [vmem:[%s216 + $0x38] sm:$0xff]
        %v251 = vadd.f32 %v243, %v244
        %252 = vadd.xlane.f32.xlu0 %v251
        %v253 = vpop.xlane.xlu0 %252
        %v254 = vadd.f32 %v245, %v246
        %255 = vadd.xlane.f32.xlu0 %v254
        %v256 = vpop.xlane.xlu0 %255
        %v257 = vadd.f32 %v247, %v248
        %258 = vadd.xlane.f32.xlu0 %v257
        %v259 = vpop.xlane.xlu0 %258
        %v260 = vadd.f32 %v249, %v250
        %261 = vadd.xlane.f32.xlu0 %v260
        %v262 = vpop.xlane.xlu0 %261
        %v263 = vrcp.pop 256.0
        %v264 = vmul.f32 %v253, %v263
        %v265 = vmul.f32 %v256, %v263
        %v266 = vmul.f32 %v259, %v263
        %v267 = vmul.f32 %v262, %v263
        %v268 = vld [vmem:[%s1] sm:$0xff]
        %v269 = vld [vmem:[%s1 + $0x8] sm:$0xff]
        %v270 = vld [vmem:[%s1 + $0x10] sm:$0xff]
        %v271 = vld [vmem:[%s1 + $0x18] sm:$0xff]
        %v272 = vld [vmem:[%s2] sm:$0x1]
        %v273 = vld [vmem:[%s3] sm:$0xf]
        %v274 = vld [vmem:[%s4] sm:$0x1]
        %v275 = vmul.f32 %v264, %v268
        %v276 = vmul.f32 %v265, %v269
        %v277 = vmul.f32 %v266, %v270
        %v278 = vmul.f32 %v267, %v271
        %vm279 = vcmask 31744
        %v280 = vsel %vm279, %v275, 0.0
        %v281 = vsel %vm279, %v276, 0.0
        %v282 = vadd.f32 %v280, %v281
        %v283 = vsel %vm279, %v277, 0.0
        %v284 = vadd.f32 %v282, %v283
        %v285 = vsel %vm279, %v278, 0.0
        %v286 = vadd.f32 %v284, %v285
        %v287 = vrot.slane %v286, 4
        %v288 = vadd.f32 %v286, %v287
        %v289 = vrot.slane %v288, 2
        %v290 = vadd.f32 %v288, %v289
        %v291 = vrot.slane %v290, 1
        %v292 = vadd.f32 %v290, %v291
        %v293 = vadd.f32 %v292, %v272
        %v294 = vmax.f32 %v293, 0.0
        %v295 = vlaneseq
        %v296 = vshrl.u32 %v295, 7
        %v297 = vsub.s32 0, %v296
        %v298 = vrot.slane %v294, %v297
        %300 = vbcast.lane.b32.xlu0 %v298, 256
        %v301 = vpop.permute.xlu0 %300
        %v302 = vmul.f32 %v301, %v273
        %vm303 = vcmask 257024
        %v304 = vsel %vm303, %v302, 0.0
        %v305 = vrot.slane %v304, 4
        %v306 = vadd.f32 %v304, %v305
        %v307 = vrot.slane %v306, 2
        %v308 = vadd.f32 %v306, %v307
        %v309 = vrot.slane %v308, 1
        %v310 = vadd.f32 %v308, %v309
        %v311 = vadd.f32 %v310, %v274
        %v312 = vxor.u32 %v311, 2147483648
        %v313 = vmul.f32 %v312, 1.442695
        %v314 = vpow.pop %v313
        %v315 = vadd.f32 %v314, 1.0
        %v316 = vrcp.pop %v315
        %v317 = vmul.f32 1.0, %v316
        %v318 = vlaneseq
        %v319 = vshrl.u32 %v318, 7
        %v320 = vsub.s32 0, %v319
        %v321 = vrot.slane %v317, %v320
        %323 = vbcast.lane.b32.xlu0 %v321, 256
        %v324 = vpop.permute.xlu0 %323
        %s326 = sor.u32 256, 8
        %327 = vbcast.lane.b32.xlu0 %v321, %s326
        %v328 = vpop.permute.xlu0 %327
        %s330 = sor.u32 256, 16
        %331 = vbcast.lane.b32.xlu0 %v321, %s330
        %v332 = vpop.permute.xlu0 %331
        %s334 = sor.u32 256, 24
        %335 = vbcast.lane.b32.xlu0 %v321, %s334
        %v336 = vpop.permute.xlu0 %335
        %v337 = vmul.f32 %v243, %v324
        %v338 = vmul.f32 %v244, %v324
        %v339 = vmul.f32 %v245, %v328
        %v340 = vmul.f32 %v246, %v328
        %v341 = vmul.f32 %v247, %v332
        %v342 = vmul.f32 %v248, %v332
        %v343 = vmul.f32 %v249, %v336
        %v344 = vmul.f32 %v250, %v336
        %345 = vst [vmem:[%s242] sm:$0xff] %v337
        %346 = vst [vmem:[%s242 + $0x8] sm:$0xff] %v338
        %347 = vst [vmem:[%s242 + $0x10] sm:$0xff] %v339
        %348 = vst [vmem:[%s242 + $0x18] sm:$0xff] %v340
        %349 = vst [vmem:[%s242 + $0x20] sm:$0xff] %v341
        %350 = vst [vmem:[%s242 + $0x28] sm:$0xff] %v342
        %351 = vst [vmem:[%s242 + $0x30] sm:$0xff] %v343
        %352 = vst [vmem:[%s242 + $0x38] sm:$0xff] %v344
        %s353 = sand.u32 %s140, 1
        %s354 = scalar_lea.sflag [#allocation4], %s353
        %s355 = sand.u32 %s140, 1
        %s356 = smul.addr %s355, 64
        %s357 = scalar_lea.vmem [#allocation5], %s356
        // Predicated region
        $region45: #{tpu_custom_call.1} parent=39 // pred_check
          %p358 = pneg %p150
        $region46: #{tpu_custom_call.1} parent=39 // pred_check_branch
          %360 = sbr.rel (%p358) target = $region48
        $region47: #{tpu_custom_call.1} parent=39 // pred_region
          %s362 = ssub.s32 1024, 1024
          %363 = vsyncadd %s354, %s362
          %s364 = smul.addr %s22, 8
          %s365 = smul.addr %s364, 128
          %s366 = scalar_lea.hbm %s5, %s365
          %s367 = sshll.u32 %s357, 4
          %s368 = int_to_ptr.vmem [resolvable:$true] %s367
          %373 = dma.vmem_to_hbm [thread:$0]  %s368, 1024, %s366, %s354, 256, 256, 16
        $region48: #{tpu_custom_call.1} parent=39 // pred_fallthru
          _
      $region40: #{tpu_custom_call.1} parent=5 // pred_fallthru
        _
      %p374 = scmp.le.s32.totalorder 2, %s17
      // Predicated region
      $region49: #{tpu_custom_call.1} parent=5 // pred_check
        %p375 = pneg %p374
      $region50: #{tpu_custom_call.1} parent=5 // pred_check_branch
        %377 = sbr.rel (%p375) target = $region52
      $region51: #{tpu_custom_call.1} parent=5 // pred_region
        %s378 = ssub.s32 %s17, 2
        // Predicated region
        $region53: #{tpu_custom_call.1} parent=51 // pred_check
          %p379 = pneg %p156
        $region54: #{tpu_custom_call.1} parent=51 // pred_check_branch
          %381 = sbr.rel (%p379) target = $region56
        $region55: #{tpu_custom_call.1} parent=51 // pred_region
          %s382 = sand.u32 %s141, 1
          %s383 = scalar_lea.sflag [#allocation4], %s382
          %s384 = sand.u32 %s141, 1
          %s385 = smul.addr %s384, 64
          %s386 = scalar_lea.vmem [#allocation5], %s385
          %387 = dma.done %s383, 1024
        $region56: #{tpu_custom_call.1} parent=51 // pred_fallthru
          _
      $region52: #{tpu_custom_call.1} parent=5 // pred_fallthru
        _
    $region6: #{tpu_custom_call.1} parent=1 // loop_footer
      %s21 = sadd.s32 1, %s17
    $region7: #{tpu_custom_call.1} parent=1 // loop_footer_branch
      %16 = sbr.rel target = $region3
    $region8: #{tpu_custom_call.1} parent=1 // loop_exit
      _
    %388 = vsyncpa [#allocation3], 1
    %s389 = scalar_lea.sflag [#allocation3], 1
    %390 = vsyncpa %s389, 1
    %391 = vsyncpa [#allocation4], 1
    %s392 = scalar_lea.sflag [#allocation4], 1
    %393 = vsyncpa %s392, 1

</llo_original>
